<compile_context>
chip_gen: v7x
topology: tpu7x:2x2x1
jax: 0.10.0
libtpu: 0.0.40
codegen_flags: <defaults>
</compile_context>

<pallas_src>
import functools
import numpy as np
import jax
import jax.numpy as jnp
from jax.experimental import pallas as pl
from jax.experimental.pallas import tpu as pltpu


def _wscale_kernel(scale, x_ref, b_ref, o_ref):
    # Fused multiply-add: o = x * scale + bias (bias column/row broadcasts).
    o_ref[...] = x_ref[...] * scale + b_ref[...]


def _pick_block(dim, pref, align):
    """Largest 'nice' block: full dim if small, else a large multiple of `align`."""
    if dim <= pref:
        return dim                              # full-dim block (always legal)
    return max(align, (pref // align) * align)  # aligned tile; ragged tail is masked


def _wscale_call_nchw(x3, bias_col, scale):
    """x3: (N, C, L) activation; bias_col: (C, 1); scale: Python float."""
    N, C, L = x3.shape
    BC = _pick_block(C, 256, 8)      # sublane axis: multiple of 8 or full C
    BL = _pick_block(L, 2048, 128)   # lane axis: lane-dense multiple of 128 or full L
    grid = (N, pl.cdiv(C, BC), pl.cdiv(L, BL))
    nbytes = x3.dtype.itemsize
    cost = pl.CostEstimate(
        flops=2 * N * C * L,
        transcendentals=0,
        bytes_accessed=2 * N * C * L * nbytes + C * nbytes)
    kernel = functools.partial(_wscale_kernel, scale)
    return pl.pallas_call(
        kernel,
        out_shape=jax.ShapeDtypeStruct((N, C, L), x3.dtype),
        grid=grid,
        in_specs=[
            pl.BlockSpec((None, BC, BL), lambda n, c, l: (n, c, l)),
            pl.BlockSpec((BC, 1), lambda n, c, l: (c, 0)),
        ],
        out_specs=pl.BlockSpec((None, BC, BL), lambda n, c, l: (n, c, l)),
        compiler_params=pltpu.CompilerParams(
            dimension_semantics=("parallel", "parallel", "parallel")),
        cost_estimate=cost,
    )(x3, bias_col)


def _wscale_call_nc(x2, bias_row, scale):
    """x2: (N, C); bias_row: (1, C); scale: Python float."""
    N, C = x2.shape
    BN = _pick_block(N, 512, 8)      # tile only over rows; keep full-C lane blocks
    grid = (pl.cdiv(N, BN),)
    nbytes = x2.dtype.itemsize
    cost = pl.CostEstimate(
        flops=2 * N * C,
        transcendentals=0,
        bytes_accessed=2 * N * C * nbytes + C * nbytes)
    kernel = functools.partial(_wscale_kernel, scale)
    return pl.pallas_call(
        kernel,
        out_shape=jax.ShapeDtypeStruct((N, C), x2.dtype),
        grid=grid,
        in_specs=[
            pl.BlockSpec((BN, C), lambda i: (i, 0)),
            pl.BlockSpec((1, C), lambda i: (0, 0)),
        ],
        out_specs=pl.BlockSpec((BN, C), lambda i: (i, 0)),
        compiler_params=pltpu.CompilerParams(
            dimension_semantics=("parallel",)),
        cost_estimate=cost,
    )(x2, bias_row)


class WScaleLayerPallas:
    """JAX/Pallas port of WScaleLayer.

    scale = gain / sqrt(in_channels * kernel_size**2) * lr_multiplier  (constant)
    forward(x) = x * scale + bias * lr_multiplier  (bias broadcast over channel dim)
    """

    def __init__(self, in_channels, out_channels, kernel_size,
                 gain=np.sqrt(2.0), lr_multiplier=1.0, bias=None):
        fan_in = in_channels * kernel_size * kernel_size
        self.scale = float(gain / np.sqrt(fan_in) * lr_multiplier)
        self.lr_multiplier = float(lr_multiplier)
        if bias is None:
            bias = jnp.zeros((out_channels,), jnp.float32)
        self.bias = bias  # shape (out_channels,)

    def __call__(self, x):
        # NOTE: bias is cast to x.dtype before the add; for bf16 activations this
        # differs slightly from PyTorch's f32 add followed by downcast.
        b_eff = (self.bias * self.lr_multiplier).astype(x.dtype)
        if x.ndim == 4:
            N, C, H, W = x.shape
            assert C == b_eff.shape[0]
            x3 = x.reshape(N, C, H * W)                     # pixels on the lane axis
            out = _wscale_call_nchw(x3, b_eff.reshape(C, 1), self.scale)
            return out.reshape(N, C, H, W)
        if x.ndim == 2:
            N, C = x.shape
            assert C == b_eff.shape[0]
            # TODO(synk): for tiny (N, C) tensors a fused plain-XLA FMA is faster
            # than a standalone pallas_call; kept in Pallas per the kernel spec.
            return _wscale_call_nc(x, b_eff.reshape(1, C), self.scale)
        raise ValueError(
            "The input tensor should be with shape [batch_size, channel, height, "
            f"width], or [batch_size, channel]!\nBut {x.shape} is received!")


if __name__ == "__main__":
    key = jax.random.PRNGKey(0)
    k_x4, k_x2, k_b = jax.random.split(key, 3)

    N, C, H, W = 2, 4, 16, 16
    in_channels, out_channels, kernel_size = 4, C, 3

    # Deterministic (non-trivial) bias so the add path is exercised.
    bias = jax.random.normal(k_b, (out_channels,), jnp.float32)

    layer = WScaleLayerPallas(in_channels, out_channels, kernel_size,
                              gain=np.sqrt(2.0), lr_multiplier=1.0, bias=bias)

    # 4D path (NCHW, like a conv activation)
    x4 = jax.random.normal(k_x4, (N, C, H, W), jnp.float32)
    y4 = jax.block_until_ready(layer(x4))
    ref4 = x4 * layer.scale + bias.reshape(1, -1, 1, 1) * layer.lr_multiplier
    np.testing.assert_allclose(np.asarray(y4), np.asarray(ref4), rtol=1e-6, atol=1e-6)

    # 2D path (dense activation)
    x2 = jax.random.normal(k_x2, (N, C), jnp.float32)
    y2 = jax.block_until_ready(layer(x2))
    ref2 = x2 * layer.scale + bias.reshape(1, -1) * layer.lr_multiplier
    np.testing.assert_allclose(np.asarray(y2), np.asarray(ref2), rtol=1e-6, atol=1e-6)

    print("KERNEL_OK")
</pallas_src>

<mosaic_0001>
module attributes {stable_mosaic.version = 11 : i64} {
  func.func @_wscale_kernel(%arg0: i32, %arg1: i32, %arg2: i32, %arg3: memref<1x4x256xf32, #tpu.memory_space<vmem>>, %arg4: memref<4x1xf32, #tpu.memory_space<vmem>>, %arg5: memref<1x4x256xf32, #tpu.memory_space<vmem>>) attributes {dimension_semantics = [#tpu.dimension_semantics<parallel>, #tpu.dimension_semantics<parallel>, #tpu.dimension_semantics<parallel>], iteration_bounds = array<i64: 2, 1, 1>, scalar_prefetch = 0 : i64, scratch_operands = 0 : i64, tpu.core_type = #tpu.core_type<tc>, window_params = [{transform_indices = @transform_0, window_bounds = array<i64: 1, 4, 256>}, {transform_indices = @transform_1, window_bounds = array<i64: 4, 1>}, {transform_indices = @transform_2, window_bounds = array<i64: 1, 4, 256>}]} {
    %c0 = arith.constant 0 : index
    %c0_0 = arith.constant 0 : index
    %c0_1 = arith.constant 0 : index
    %0 = vector.load %arg3[%c0, %c0_0, %c0_1] : memref<1x4x256xf32, #tpu.memory_space<vmem>>, vector<1x4x256xf32>
    %1 = vector.shape_cast %0 : vector<1x4x256xf32> to vector<4x256xf32>
    %cst = arith.constant 0.235702261 : f32
    %2 = vector.broadcast %cst : f32 to vector<4x256xf32>
    %3 = arith.mulf %1, %2 : vector<4x256xf32>
    %c0_2 = arith.constant 0 : index
    %c0_3 = arith.constant 0 : index
    %4 = vector.load %arg4[%c0_2, %c0_3] : memref<4x1xf32, #tpu.memory_space<vmem>>, vector<4x1xf32>
    %5 = vector.broadcast %4 : vector<4x1xf32> to vector<4x256xf32>
    %6 = arith.addf %3, %5 : vector<4x256xf32>
    %c0_4 = arith.constant 0 : index
    %c0_5 = arith.constant 0 : index
    %c0_6 = arith.constant 0 : index
    %7 = vector.load %arg5[%c0_4, %c0_5, %c0_6] : memref<1x4x256xf32, #tpu.memory_space<vmem>>, vector<1x4x256xf32>
    %8 = vector.shape_cast %7 : vector<1x4x256xf32> to vector<4x256xf32>
    %9 = vector.shape_cast %6 : vector<4x256xf32> to vector<1x4x256xf32>
    tpu.vector_store %arg5[%c0_4, %c0_5, %c0_6], %9 {strides = array<i32>} : memref<1x4x256xf32, #tpu.memory_space<vmem>>, vector<1x4x256xf32>,
    return
  }
  func.func @transform_0(%arg0: i32, %arg1: i32, %arg2: i32) -> (i32, i32, i32) {
    %c0_i32 = arith.constant 0 : i32
    return %arg0, %arg1, %arg2 : i32, i32, i32
  }
  func.func @transform_1(%arg0: i32, %arg1: i32, %arg2: i32) -> (i32, i32) {
    %c0_i32 = arith.constant 0 : i32
    %c0_i32_0 = arith.constant 0 : i32
    return %arg1, %c0_i32 : i32, i32
  }
  func.func @transform_2(%arg0: i32, %arg1: i32, %arg2: i32) -> (i32, i32, i32) {
    %c0_i32 = arith.constant 0 : i32
    return %arg0, %arg1, %arg2 : i32, i32, i32
  }
}

</mosaic_0001>

<llo_original>
// kernel: tpu_custom_call.1
$region0: #{tpu_custom_call.1}
  #allocation0 [shape = 'u32[]', space=smem, size = 0x4, offset = 0x4, fixed_abs, tag = 'smem constant byte address 0x4 - core index']
  #allocation1 [shape = 'u32[144,128]{1,0:T(1,128)}', space=vmem, size = 0x12000, scoped, tag = 'internal scratch']
  %s0 = inlined_call_operand.hbm [shape: f32[2,4,256], index: 0, kind: input, shape index: {}]
  %s1 = inlined_call_operand.vmem [shape: f32[4,1], index: 1, kind: input, shape index: {}]
  %s2 = inlined_call_operand.hbm [shape: f32[2,4,256], index: 2, kind: output, shape index: {}]
  %s3 = sld [smem:[#allocation0]]
  $region45: #{tpu_custom_call.1} parent=0
    _
  %s5 = ssub.s32 1, %s3
  %s6 = scalar_select 0, %s5, %s3
  $region1: #{tpu_custom_call.1} parent=0
    #allocation2 [shape = 'u8[8192]{0}', space=vmem, size = 0x2000, scoped, tag = 'input window, operand 0']
    #allocation3 [shape = 's32[2]{0}', space=sflag, size = 0x8, scoped, tag = 'scoped memory for tpu_custom_call.1']
    #allocation4 [shape = 's32[2]{0}', space=sflag, size = 0x8, scoped, tag = 'scoped memory for tpu_custom_call.1']
    #allocation5 [shape = 'u8[8192]{0}', space=vmem, size = 0x2000, scoped, tag = 'output window, operand 0']
    %7 = vsyncpa [#allocation3], 0
    %s8 = scalar_lea.sflag [#allocation3], 1
    %9 = vsyncpa %s8, 0
    %10 = vsyncpa [#allocation4], 0
    %s11 = scalar_lea.sflag [#allocation4], 1
    %12 = vsyncpa %s11, 0
    loop: start=0, step=1, limit=4
    $region2: #{tpu_custom_call.1} parent=1 // loop_pre_header
      _
    $region3: #{tpu_custom_call.1} parent=1 // loop_header
      %s14 = sphi 0, %s18
      %p15 = scmp.ge.s32.totalorder %s14, 4
      %s21 = sphi 0, %s40
      %s22 = sphi 0, %s36
      %s23 = sphi 0, %s32
      %s24 = sphi 0, %s21
      %s25 = sphi 0, %s22
      %s26 = sphi 0, %s23
      %s27 = sphi 0, %s24
      %s28 = sphi 0, %s25
      %s29 = sphi 0, %s26
      %s47 = sphi 0, %s49
      %s50 = sphi 0, %s47
      %s51 = sphi 0, %s50
      %s67 = sphi 0, %s51
      %s73 = sphi 0, %s75
      %s76 = sphi 0, %s73
      %s77 = sphi 0, %s76
      %s93 = sphi 0, %s77
      %s103 = sphi 0, %s105
      %s106 = sphi 0, %s103
      %s107 = sphi 0, %s106
      %s123 = sphi 0, %s107
    $region4: #{tpu_custom_call.1} parent=1 // loop_header_branch
      %17 = sbr.rel (%p15) target = $region8
    $region5: #{tpu_custom_call.1} parent=1 // loop_body
      %s19 = ssub.s32 %s14, 1
      %s20 = ssub.s32 %s14, 2
      %s30 = sadd.s32 1, %s23
      %p31 = scmp.ge.s32.totalorder %s30, 1
      %s32 = scalar_select %p31, 0, %s30
      %s33 = sadd.s32 1, %s22
      %s34 = scalar_select %p31, %s33, %s22
      %p35 = scmp.ge.s32.totalorder %s34, 1
      %s36 = scalar_select %p35, 0, %s34
      %s37 = sadd.s32 1, %s21
      %s38 = scalar_select %p35, %s37, %s21
      %p39 = scmp.ge.s32.totalorder %s38, 2
      %s40 = scalar_select %p39, 0, %s38
      %s41 = ssub.s32 %s21, %s40
      %s42 = ssub.s32 %s22, %s36
      %s43 = sor.u32 %s41, %s42
      %s44 = ssub.s32 %s23, %s32
      %s45 = sor.u32 %s43, %s44
      %p46 = scmp.eq.s32.totalorder %s45, 0
      %s48 = sadd.s32 %s47, 1
      %s49 = scalar_select %p46, %s47, %s48
      %p52 = pneg %p46
      %p53 = scmp.eq.s32.totalorder %s14, 1
      %p54 = por %p52, %p53
      %p55 = scmp.ne.s32.totalorder %s47, %s50
      %p56 = scmp.eq.s32.totalorder %s14, 0
      %p57 = por %p55, %p56
      %p58 = scmp.ne.s32.totalorder %s47, %s50
      %p59 = scmp.eq.s32.totalorder %s19, 1
      %p60 = por %p58, %p59
      %p61 = scmp.ne.s32.totalorder %s50, %s51
      %p62 = scmp.eq.s32.totalorder %s19, 0
      %p63 = por %p61, %p62
      %p64 = scmp.ne.s32.totalorder %s50, %s51
      %p65 = scmp.eq.s32.totalorder %s20, 1
      %p66 = por %p64, %p65
      %p68 = scmp.ne.s32.totalorder %s51, %s67
      %p69 = scmp.eq.s32.totalorder %s20, 0
      %p70 = por %p68, %p69
      %s71 = ssub.s32 %s22, %s36
      %p72 = scmp.eq.s32.totalorder %s71, 0
      %s74 = sadd.s32 %s73, 1
      %s75 = scalar_select %p72, %s73, %s74
      %p78 = pneg %p72
      %p79 = scmp.eq.s32.totalorder %s14, 1
      %p80 = por %p78, %p79
      %p81 = scmp.ne.s32.totalorder %s73, %s76
      %p82 = scmp.eq.s32.totalorder %s14, 0
      %p83 = por %p81, %p82
      %p84 = scmp.ne.s32.totalorder %s73, %s76
      %p85 = scmp.eq.s32.totalorder %s19, 1
      %p86 = por %p84, %p85
      %p87 = scmp.ne.s32.totalorder %s76, %s77
      %p88 = scmp.eq.s32.totalorder %s19, 0
      %p89 = por %p87, %p88
      %p90 = scmp.ne.s32.totalorder %s76, %s77
      %p91 = scmp.eq.s32.totalorder %s20, 1
      %p92 = por %p90, %p91
      %p94 = scmp.ne.s32.totalorder %s77, %s93
      %p95 = scmp.eq.s32.totalorder %s20, 0
      %p96 = por %p94, %p95
      %s97 = ssub.s32 %s21, %s40
      %s98 = ssub.s32 %s22, %s36
      %s99 = sor.u32 %s97, %s98
      %s100 = ssub.s32 %s23, %s32
      %s101 = sor.u32 %s99, %s100
      %p102 = scmp.eq.s32.totalorder %s101, 0
      %s104 = sadd.s32 %s103, 1
      %s105 = scalar_select %p102, %s103, %s104
      %p108 = pneg %p102
      %p109 = scmp.eq.s32.totalorder %s14, 1
      %p110 = por %p108, %p109
      %p111 = scmp.ne.s32.totalorder %s103, %s106
      %p112 = scmp.eq.s32.totalorder %s14, 0
      %p113 = por %p111, %p112
      %p114 = scmp.ne.s32.totalorder %s103, %s106
      %p115 = scmp.eq.s32.totalorder %s19, 1
      %p116 = por %p114, %p115
      %p117 = scmp.ne.s32.totalorder %s106, %s107
      %p118 = scmp.eq.s32.totalorder %s19, 0
      %p119 = por %p117, %p118
      %p120 = scmp.ne.s32.totalorder %s106, %s107
      %p121 = scmp.eq.s32.totalorder %s20, 1
      %p122 = por %p120, %p121
      %p124 = scmp.ne.s32.totalorder %s107, %s123
      %p125 = scmp.eq.s32.totalorder %s20, 0
      %p126 = por %p124, %p125
      %p127 = scmp.le.s32.totalorder 1, %s14
      %p128 = scmp.lt.s32.totalorder %s14, 3
      %p129 = pnand %p127, %p128
      %p130 = pneg %p129
      // Predicated region
      $region9: #{tpu_custom_call.1} parent=5 // pred_check
        _
      $region10: #{tpu_custom_call.1} parent=5 // pred_check_branch
        %132 = sbr.rel (%p129) target = $region12
      $region11: #{tpu_custom_call.1} parent=5 // pred_region
        %s133 = ssub.s32 %s14, 1
        // Predicated region
        $region13: #{tpu_custom_call.1} parent=11 // pred_check
          %p134 = pneg %p89
        $region14: #{tpu_custom_call.1} parent=11 // pred_check_branch
          %136 = sbr.rel (%p134) target = $region16
        $region15: #{tpu_custom_call.1} parent=11 // pred_region
          %p137 = scmp.lt.s32.totalorder %s25, 0
          %s138 = scalar_select %p137, %s25, 0
          %s139 = smul.addr %s138, 4
          %s140 = scalar_lea.vmem %s1, %s139
        $region16: #{tpu_custom_call.1} parent=11 // pred_fallthru
          _
      $region12: #{tpu_custom_call.1} parent=5 // pred_fallthru
        _
      %p141 = scmp.lt.s32.totalorder %s14, 2
      // Predicated region
      $region17: #{tpu_custom_call.1} parent=5 // pred_check
        %p142 = pneg %p141
      $region18: #{tpu_custom_call.1} parent=5 // pred_check_branch
        %144 = sbr.rel (%p142) target = $region20
      $region19: #{tpu_custom_call.1} parent=5 // pred_region
        // Predicated region
        $region21: #{tpu_custom_call.1} parent=19 // pred_check
          %p145 = pneg %p57
        $region22: #{tpu_custom_call.1} parent=19 // pred_check_branch
          %147 = sbr.rel (%p145) target = $region24
        $region23: #{tpu_custom_call.1} parent=19 // pred_region
          %s148 = sand.u32 %s47, 1
          %s149 = scalar_lea.sflag [#allocation3], %s148
          %s150 = sand.u32 %s47, 1
          %s151 = smul.addr %s150, 8
          %s152 = scalar_lea.vmem [#allocation2], %s151
          %s153 = smul.u32 2, %s23
          %s155 = ssub.s32 128, 128
          %156 = vsyncadd %s149, %s155
          %s157 = smul.addr %s22, 2
          %s158 = sadd.s32 %s153, %s157
          %s159 = smul.addr %s21, 2
          %s160 = sadd.s32 %s158, %s159
          %s161 = smul.addr %s160, 64
          %s162 = scalar_lea.hbm %s0, %s161
          %s164 = sshll.u32 %s152, 4
          %s165 = int_to_ptr.vmem [resolvable:$true] %s164
          %167 = dma.hbm_to_vmem [thread:$0]  %s162, 128, %s165, %s149
        $region24: #{tpu_custom_call.1} parent=19 // pred_fallthru
          _
      $region20: #{tpu_custom_call.1} parent=5 // pred_fallthru
        _
      %p168 = scmp.le.s32.totalorder 1, %s14
      %p169 = scmp.lt.s32.totalorder %s14, 3
      %p170 = pnand %p168, %p169
      %p171 = pneg %p170
      // Predicated region
      $region25: #{tpu_custom_call.1} parent=5 // pred_check
        _
      $region26: #{tpu_custom_call.1} parent=5 // pred_check_branch
        %173 = sbr.rel (%p170) target = $region28
      $region27: #{tpu_custom_call.1} parent=5 // pred_region
        %s174 = ssub.s32 %s14, 1
        %s175 = sand.u32 %s50, 1
        %s176 = scalar_lea.sflag [#allocation3], %s175
        %s177 = sand.u32 %s50, 1
        %s178 = smul.addr %s177, 8
        %s179 = scalar_lea.vmem [#allocation2], %s178
        // Predicated region
        $region29: #{tpu_custom_call.1} parent=27 // pred_check
          %p180 = pneg %p63
        $region30: #{tpu_custom_call.1} parent=27 // pred_check_branch
          %182 = sbr.rel (%p180) target = $region32
        $region31: #{tpu_custom_call.1} parent=27 // pred_region
          %183 = dma.done %s176, 128
        $region32: #{tpu_custom_call.1} parent=27 // pred_fallthru
          _
        %s184 = sand.u32 %s50, 1
        %s185 = scalar_lea.sflag [#allocation3], %s184
        %s186 = sand.u32 %s50, 1
        %s187 = smul.addr %s186, 8
        %s188 = scalar_lea.vmem [#allocation2], %s187
        %p189 = pneg %p63
        %p190 = pneg %p60
        %p191 = scmp.lt.s32.totalorder %s25, 0
        %s192 = scalar_select %p191, %s25, 0
        %s193 = smul.addr %s192, 4
        %s194 = scalar_lea.vmem %s1, %s193
        %p195 = pneg %p89
        %p196 = pneg %p86
        %p197 = pneg %p119
        %p198 = pneg %p116
        %s199 = sand.u32 %s106, 1
        %s200 = scalar_lea.sflag [#allocation4], %s199
        %s201 = sand.u32 %s106, 1
        %s202 = smul.addr %s201, 8
        %s203 = scalar_lea.vmem [#allocation5], %s202
        %s204 = smul.u32 2, %s26
        %p205 = scmp.lt.s32.totalorder %s25, 0
        %s206 = scalar_select %p205, %s25, 0
        %s207 = smul.addr %s206, 4
        %s208 = scalar_lea.vmem %s1, %s207
        %s209 = smul.u32 2, %s26
        %v210 = vld [vmem:[%s179] sm:$0xff]
        %v211 = vmul.f32 %v210, 0.23570226
        %v212 = vld [vmem:[%s208] sm:$0xf]
        %214 = vset.pattern.permute.xlu0 0
        %215 = vperm.xlu0 %214, %v212
        %v216 = vpop.permute.xlu0 %215
        %v218 = vunpack.c.l.s4 839922192
        %v219 = vunpack.c.0.s8 %v218
        %v220 = vlaneseq
        %v221 = vshrl.u32 %v220, 7
        %v222 = vsub.s32 %v219, %v221
        %v223 = vrot.slane %v216, %v222
        %v225 = vadd.f32 %v211, %v223
        %226 = vst [vmem:[%s203] sm:$0xff] %v225
        %s227 = sand.u32 %s106, 1
        %s228 = scalar_lea.sflag [#allocation4], %s227
        %s229 = sand.u32 %s106, 1
        %s230 = smul.addr %s229, 8
        %s231 = scalar_lea.vmem [#allocation5], %s230
        // Predicated region
        $region33: #{tpu_custom_call.1} parent=27 // pred_check
          %p232 = pneg %p116
        $region34: #{tpu_custom_call.1} parent=27 // pred_check_branch
          %234 = sbr.rel (%p232) target = $region36
        $region35: #{tpu_custom_call.1} parent=27 // pred_region
          %s235 = smul.u32 2, %s26
          %s237 = ssub.s32 128, 128
          %238 = vsyncadd %s228, %s237
          %s239 = smul.addr %s25, 2
          %s240 = sadd.s32 %s235, %s239
          %s241 = smul.addr %s24, 2
          %s242 = sadd.s32 %s240, %s241
          %s243 = smul.addr %s242, 64
          %s244 = scalar_lea.hbm %s2, %s243
          %s246 = sshll.u32 %s231, 4
          %s247 = int_to_ptr.vmem [resolvable:$true] %s246
          %249 = dma.vmem_to_hbm [thread:$0]  %s247, 128, %s244, %s228
        $region36: #{tpu_custom_call.1} parent=27 // pred_fallthru
          _
      $region28: #{tpu_custom_call.1} parent=5 // pred_fallthru
        _
      %p250 = scmp.le.s32.totalorder 2, %s14
      // Predicated region
      $region37: #{tpu_custom_call.1} parent=5 // pred_check
        %p251 = pneg %p250
      $region38: #{tpu_custom_call.1} parent=5 // pred_check_branch
        %253 = sbr.rel (%p251) target = $region40
      $region39: #{tpu_custom_call.1} parent=5 // pred_region
        %s254 = ssub.s32 %s14, 2
        // Predicated region
        $region41: #{tpu_custom_call.1} parent=39 // pred_check
          %p255 = pneg %p122
        $region42: #{tpu_custom_call.1} parent=39 // pred_check_branch
          %257 = sbr.rel (%p255) target = $region44
        $region43: #{tpu_custom_call.1} parent=39 // pred_region
          %s258 = sand.u32 %s107, 1
          %s259 = scalar_lea.sflag [#allocation4], %s258
          %s260 = sand.u32 %s107, 1
          %s261 = smul.addr %s260, 8
          %s262 = scalar_lea.vmem [#allocation5], %s261
          %263 = dma.done %s259, 128
        $region44: #{tpu_custom_call.1} parent=39 // pred_fallthru
          _
      $region40: #{tpu_custom_call.1} parent=5 // pred_fallthru
        _
    $region6: #{tpu_custom_call.1} parent=1 // loop_footer
      %s18 = sadd.s32 1, %s14
    $region7: #{tpu_custom_call.1} parent=1 // loop_footer_branch
      %13 = sbr.rel target = $region3
    $region8: #{tpu_custom_call.1} parent=1 // loop_exit
      _
    %264 = vsyncpa [#allocation3], 1
    %s265 = scalar_lea.sflag [#allocation3], 1
    %266 = vsyncpa %s265, 1
    %267 = vsyncpa [#allocation4], 1
    %s268 = scalar_lea.sflag [#allocation4], 1
    %269 = vsyncpa %s268, 1

</llo_original>
